<compile_context>
chip_gen: v7x
topology: tpu7x:2x2x1
jax: 0.10.0
libtpu: 0.0.40
codegen_flags: <defaults>
</compile_context>

<pallas_src>
import math
import functools

import jax
import jax.numpy as jnp
from jax import lax
from jax.experimental import pallas as pl
from jax.experimental.pallas import tpu as pltpu


# ----------------------------------------------------------------------------
# Parameter / buffer setup (glue, plain JAX) — deterministic, mirrors __init__.
# ----------------------------------------------------------------------------
def make_sinusoidal_pe(embedding_dim: int, max_len: int = 128) -> jnp.ndarray:
    position = jnp.arange(0, max_len, dtype=jnp.float32)[:, None]            # [L, 1]
    div_term = jnp.exp(
        jnp.arange(0, embedding_dim, 2, dtype=jnp.float32)
        * (-math.log(10000.0) / embedding_dim)
    )                                                                          # [E/2]
    pe = jnp.zeros((max_len, embedding_dim), dtype=jnp.float32)
    pe = pe.at[:, 0::2].set(jnp.sin(position * div_term))
    pe = pe.at[:, 1::2].set(jnp.cos(position * div_term))
    # .unsqueeze(0).transpose(0, 1) -> [max_len, 1, embedding_dim]
    return pe[:, None, :]


# ----------------------------------------------------------------------------
# Pallas kernel: out = dropout(x + pe[:S])
# ----------------------------------------------------------------------------
def _pos_embed_kernel(seed_ref, x_ref, pe_ref, o_ref, *, dropout_p, training):
    tS = x_ref.shape[0]
    start = pl.program_id(0) * tS

    # pe is fully resident in VMEM; slice out the rows for this sequence tile
    # and broadcast over the batch dim.
    pe_tile = pe_ref[pl.ds(start, tS), :, :]                       # [tS, 1, E]
    v = x_ref[...].astype(jnp.float32) + pe_tile.astype(jnp.float32)

    if training and 0.0 < dropout_p < 1.0:
        # Stateless per-element hash RNG (plain integer VPU ops; no TPU-only
        # PRNG primitives, so this also lowers under interpret mode).
        shp = v.shape
        row = lax.broadcasted_iota(jnp.int32, shp, 0) + start
        b_i = lax.broadcasted_iota(jnp.int32, shp, 1)
        e_i = lax.broadcasted_iota(jnp.int32, shp, 2)
        idx = (row * shp[1] + b_i) * shp[2] + e_i                  # global element id

        h = idx ^ seed_ref[0]
        h = (h ^ lax.shift_right_logical(h, jnp.int32(16))) * jnp.int32(0x7FEB352D)
        h = (h ^ lax.shift_right_logical(h, jnp.int32(15))) * jnp.int32(-2073254261)
        h = h ^ lax.shift_right_logical(h, jnp.int32(16))

        # Top 24 hash bits -> uniform integer in [0, 2^24); integer threshold compare.
        r24 = lax.shift_right_logical(h, jnp.int32(8))
        thresh = int(round(dropout_p * (1 << 24)))
        keep = r24 >= jnp.int32(thresh)
        scale = jnp.float32(1.0 / (1.0 - dropout_p))
        v = jnp.where(keep, v, 0.0) * scale

    o_ref[...] = v.astype(o_ref.dtype)


def _pick_seq_tile(S, B, E, itemsize, budget_bytes):
    """Largest divisor of S whose [tS, B, E] block stays under budget_bytes."""
    row_bytes = B * E * itemsize
    max_rows = max(1, budget_bytes // row_bytes)
    tS = min(S, int(max_rows))
    while S % tS != 0:
        tS -= 1
    return tS


def position_embedding(x, pe, *, dropout_p=0.1, training=False, seed=0,
                       block_bytes=4 << 20, min_pallas_bytes=16 << 10):
    """x: [S, B, E]; pe: [max_len, 1, E] float32 -> [S, B, E] (same dtype as x)."""
    S, B, E = x.shape
    pe_s = pe[:S]                                                  # [S, 1, E]
    total_bytes = x.size * x.dtype.itemsize

    # For genuinely tiny inputs, kernel launch + pipeline overhead dwarfs the DMA;
    # let XLA's fused elementwise path handle it.
    if total_bytes < min_pallas_bytes:
        out = x.astype(jnp.float32) + pe_s.astype(jnp.float32)
        if training and 0.0 < dropout_p < 1.0:
            key = jax.random.PRNGKey(seed)
            keep = jax.random.bernoulli(key, 1.0 - dropout_p, out.shape)
            out = jnp.where(keep, out / (1.0 - dropout_p), 0.0)
        return out.astype(x.dtype)

    tS = _pick_seq_tile(S, B, E, x.dtype.itemsize, block_bytes)

    kernel = functools.partial(
        _pos_embed_kernel, dropout_p=float(dropout_p), training=bool(training)
    )

    grid_spec = pltpu.PrefetchScalarGridSpec(
        num_scalar_prefetch=1,                      # seed lands in SMEM
        grid=(S // tS,),
        in_specs=[
            # x streamed in large lane-dense tiles (last two dims are full B, E).
            pl.BlockSpec((tS, B, E), lambda i, seed: (i, 0, 0)),
            # pe[:S] kept resident: same block every step -> DMA'd once.
            pl.BlockSpec((S, 1, E), lambda i, seed: (0, 0, 0)),
        ],
        out_specs=pl.BlockSpec((tS, B, E), lambda i, seed: (i, 0, 0)),
    )

    return pl.pallas_call(
        kernel,
        out_shape=jax.ShapeDtypeStruct((S, B, E), x.dtype),
        grid_spec=grid_spec,
        compiler_params=pltpu.CompilerParams(
            # Independent per-tile work: shard the seq axis across TensorCores
            # (helps v7x megacore; neutral on single-TC v5e/v6e).
            dimension_semantics=("parallel",)
        ),
    )(jnp.asarray([seed], dtype=jnp.int32), x, pe_s)


# ----------------------------------------------------------------------------
# Demo / correctness check
# ----------------------------------------------------------------------------
if __name__ == "__main__":
    embedding_dim = 128   # multiple of 128 -> lane-dense blocks / unmasked stores
    max_len = 128
    seq_len = 32
    batch = 8             # fills the 8 sublanes

    key = jax.random.PRNGKey(0)
    x = jax.random.normal(key, (seq_len, batch, embedding_dim), dtype=jnp.float32)

    pe = make_sinusoidal_pe(embedding_dim, max_len)

    # Eval-mode forward (dropout is identity), matching module.eval() semantics.
    out = jax.block_until_ready(
        position_embedding(x, pe, dropout_p=0.1, training=False)
    )
    ref = x + pe[:seq_len]
    assert out.shape == (seq_len, batch, embedding_dim)
    assert jnp.allclose(out, ref, atol=1e-6), "mismatch vs reference (eval path)"

    # Training-mode dropout path (in-kernel hash RNG).
    # TODO(synk): dropout mask uses a stateless hash RNG, so it will not
    # bit-match torch.nn.Dropout's RNG stream — semantics/statistics only.
    p = 0.1
    out_tr = jax.block_until_ready(
        position_embedding(x, pe, dropout_p=p, training=True, seed=1234)
    )
    assert out_tr.shape == (seq_len, batch, embedding_dim)
    scale = 1.0 / (1.0 - p)
    nz = out_tr != 0
    # Kept elements are exactly the scaled (x + pe) values.
    assert jnp.allclose(out_tr[nz], (ref * scale)[nz], atol=1e-5)
    drop_frac = 1.0 - float(jnp.mean(nz.astype(jnp.float32)))
    assert 0.02 < drop_frac < 0.25, f"unexpected drop fraction {drop_frac}"

    print("KERNEL_OK")
</pallas_src>

<mosaic_0001>
module attributes {stable_mosaic.version = 11 : i64} {
  func.func @_pos_embed_kernel(%arg0: i32, %arg1: memref<1xi32, #tpu.memory_space<smem>>, %arg2: memref<32x8x128xf32, #tpu.memory_space<vmem>>, %arg3: memref<32x1x128xf32, #tpu.memory_space<vmem>>, %arg4: memref<32x8x128xf32, #tpu.memory_space<vmem>>) attributes {dimension_semantics = [#tpu.dimension_semantics<parallel>], iteration_bounds = array<i64: 1>, scalar_prefetch = 1 : i64, scratch_operands = 0 : i64, tpu.core_type = #tpu.core_type<tc>, window_params = [{transform_indices = @transform_0, window_bounds = array<i64: 32, 8, 128>}, {pipeline_mode = #tpu.pipeline_mode<synchronous>, transform_indices = @transform_1, window_bounds = array<i64: 32, 1, 128>}, {transform_indices = @transform_2, window_bounds = array<i64: 32, 8, 128>}]} {
    %c32_i32 = arith.constant 32 : i32
    %0 = arith.muli %arg0, %c32_i32 : i32
    %1 = arith.index_cast %0 : i32 to index
    %c0 = arith.constant 0 : index
    %c0_0 = arith.constant 0 : index
    %2 = vector.load %arg3[%1, %c0, %c0_0] : memref<32x1x128xf32, #tpu.memory_space<vmem>>, vector<32x1x128xf32>
    %c0_1 = arith.constant 0 : index
    %c0_2 = arith.constant 0 : index
    %c0_3 = arith.constant 0 : index
    %3 = vector.load %arg2[%c0_1, %c0_2, %c0_3] : memref<32x8x128xf32, #tpu.memory_space<vmem>>, vector<32x8x128xf32>
    %4 = vector.broadcast %2 : vector<32x1x128xf32> to vector<32x8x128xf32>
    %5 = arith.addf %3, %4 : vector<32x8x128xf32>
    %c0_4 = arith.constant 0 : index
    %c0_5 = arith.constant 0 : index
    %c0_6 = arith.constant 0 : index
    %6 = vector.load %arg4[%c0_4, %c0_5, %c0_6] : memref<32x8x128xf32, #tpu.memory_space<vmem>>, vector<32x8x128xf32>
    tpu.vector_store %arg4[%c0_4, %c0_5, %c0_6], %5 {strides = array<i32>} : memref<32x8x128xf32, #tpu.memory_space<vmem>>, vector<32x8x128xf32>,
    return
  }
  func.func @transform_0(%arg0: i32, %arg1: memref<1xi32, #tpu.memory_space<smem>>) -> (i32, i32, i32) {
    %c0_i32 = arith.constant 0 : i32
    %c0_i32_0 = arith.constant 0 : i32
    %c0_i32_1 = arith.constant 0 : i32
    return %arg0, %c0_i32, %c0_i32_0 : i32, i32, i32
  }
  func.func @transform_1(%arg0: i32, %arg1: memref<1xi32, #tpu.memory_space<smem>>) -> (i32, i32, i32) {
    %c0_i32 = arith.constant 0 : i32
    %c0_i32_0 = arith.constant 0 : i32
    %c0_i32_1 = arith.constant 0 : i32
    %c0_i32_2 = arith.constant 0 : i32
    return %c0_i32, %c0_i32_0, %c0_i32_1 : i32, i32, i32
  }
  func.func @transform_2(%arg0: i32, %arg1: memref<1xi32, #tpu.memory_space<smem>>) -> (i32, i32, i32) {
    %c0_i32 = arith.constant 0 : i32
    %c0_i32_0 = arith.constant 0 : i32
    %c0_i32_1 = arith.constant 0 : i32
    return %arg0, %c0_i32, %c0_i32_0 : i32, i32, i32
  }
}

</mosaic_0001>

<llo_original>
// kernel: tpu_custom_call.1
$region0: #{tpu_custom_call.1}
  #allocation0 [shape = 'u32[]', space=smem, size = 0x4, offset = 0x4, fixed_abs, tag = 'smem constant byte address 0x4 - core index']
  #allocation1 [shape = 'u32[144,128]{1,0:T(1,128)}', space=vmem, size = 0x12000, scoped, tag = 'internal scratch']
  #allocation2 [shape = 's32[1]{0}', space=sflag, size = 0x4, scoped, tag = 'scoped memory for tpu_custom_call.1']
  #allocation3 [shape = 's32[1]{0:T(128)S(6)}', space=smem, size = 0x200, scoped, tag = 'prefetched SMEM operand 0']
  %s0 = inlined_call_operand.<no memory space> [shape: s32[1], index: 0, kind: input, shape index: {}]
  %s1 = inlined_call_operand.hbm [shape: f32[32,8,128], index: 1, kind: input, shape index: {}]
  %s2 = inlined_call_operand.hbm [shape: f32[32,1,128], index: 2, kind: input, shape index: {}]
  %s3 = inlined_call_operand.hbm [shape: f32[32,8,128], index: 3, kind: output, shape index: {}]
  %s4 = sld [smem:[#allocation0]]
  $region26: #{tpu_custom_call.1} parent=0
    _
  %s6 = ssub.s32 1, %s4
  %s7 = scalar_select 0, %s6, %s4
  %8 = sst [smem:[#allocation3]] %s0
  $region1: #{tpu_custom_call.1} parent=0
    #allocation4 [shape = 'u8[131072]{0}', space=vmem, size = 0x20000, scoped, tag = 'input window, operand 1, single buffered']
    #allocation5 [shape = 's32[1]{0}', space=sflag, size = 0x4, scoped, tag = 'scoped memory for tpu_custom_call.1']
    #allocation6 [shape = 's32[1]{0}', space=sflag, size = 0x4, scoped, tag = 'scoped memory for tpu_custom_call.1']
    #allocation7 [shape = 'u8[16384]{0}', space=vmem, size = 0x4000, scoped, tag = 'input window, operand 2, single buffered']
    #allocation8 [shape = 's32[1]{0}', space=sflag, size = 0x4, scoped, tag = 'scoped memory for tpu_custom_call.1']
    #allocation9 [shape = 'u8[131072]{0}', space=vmem, size = 0x20000, scoped, tag = 'output window, operand 0, single buffered']
    %9 = vsyncpa [#allocation5], 0
    %10 = vsyncpa [#allocation8], 0
    %11 = vsyncpa [#allocation6], 0
    // Predicated region
    $region2: #{tpu_custom_call.1} parent=1 // pred_check
      _
    $region3: #{tpu_custom_call.1} parent=1 // pred_check_branch
      %13 = sbr.rel (0) target = $region5
    $region4: #{tpu_custom_call.1} parent=1 // pred_region
      %s15 = ssub.s32 4096, 4096
      %16 = vsyncadd [#allocation5], %s15
      %s17 = sshll.u32 [#allocation4], 4
      %s18 = int_to_ptr.vmem [resolvable:$true] %s17
      %23 = dma.hbm_to_vmem [thread:$0]  %s1, 4096, %s18, [#allocation5], 128, 128, 8
    $region5: #{tpu_custom_call.1} parent=1 // pred_fallthru
      _
    // Predicated region
    $region6: #{tpu_custom_call.1} parent=1 // pred_check
      _
    $region7: #{tpu_custom_call.1} parent=1 // pred_check_branch
      %25 = sbr.rel (0) target = $region9
    $region8: #{tpu_custom_call.1} parent=1 // pred_region
      %s27 = ssub.s32 512, 512
      %28 = vsyncadd [#allocation8], %s27
      %s29 = sshll.u32 [#allocation7], 4
      %s30 = int_to_ptr.vmem [resolvable:$true] %s29
      %35 = dma.hbm_to_vmem [thread:$0]  %s2, 512, %s30, [#allocation8], 16, 16, 1
    $region9: #{tpu_custom_call.1} parent=1 // pred_fallthru
      _
    // Predicated region
    $region10: #{tpu_custom_call.1} parent=1 // pred_check
      _
    $region11: #{tpu_custom_call.1} parent=1 // pred_check_branch
      %37 = sbr.rel (0) target = $region13
    $region12: #{tpu_custom_call.1} parent=1 // pred_region
      %38 = dma.done [#allocation5], 4096
    $region13: #{tpu_custom_call.1} parent=1 // pred_fallthru
      _
    // Predicated region
    $region14: #{tpu_custom_call.1} parent=1 // pred_check
      _
    $region15: #{tpu_custom_call.1} parent=1 // pred_check_branch
      %40 = sbr.rel (0) target = $region17
    $region16: #{tpu_custom_call.1} parent=1 // pred_region
      %41 = dma.done [#allocation8], 512
    $region17: #{tpu_custom_call.1} parent=1 // pred_fallthru
      _
    %s42 = smul.u32 0, 32
    %s43 = scalar_lea.vmem [#allocation7], %s42
    %v44 = vld [vmem:[%s43] sm:$0x1]
    %v45 = vld [vmem:[%s43 + $0x1] sm:$0x1]
    %v46 = vld [vmem:[%s43 + $0x2] sm:$0x1]
    %v47 = vld [vmem:[%s43 + $0x3] sm:$0x1]
    %v48 = vld [vmem:[%s43 + $0x4] sm:$0x1]
    %v49 = vld [vmem:[%s43 + $0x5] sm:$0x1]
    %v50 = vld [vmem:[%s43 + $0x6] sm:$0x1]
    %v51 = vld [vmem:[%s43 + $0x7] sm:$0x1]
    %v52 = vld [vmem:[%s43 + $0x8] sm:$0x1]
    %v53 = vld [vmem:[%s43 + $0x9] sm:$0x1]
    %v54 = vld [vmem:[%s43 + $0xa] sm:$0x1]
    %v55 = vld [vmem:[%s43 + $0xb] sm:$0x1]
    %v56 = vld [vmem:[%s43 + $0xc] sm:$0x1]
    %v57 = vld [vmem:[%s43 + $0xd] sm:$0x1]
    %v58 = vld [vmem:[%s43 + $0xe] sm:$0x1]
    %v59 = vld [vmem:[%s43 + $0xf] sm:$0x1]
    %v60 = vld [vmem:[%s43 + $0x10] sm:$0x1]
    %v61 = vld [vmem:[%s43 + $0x11] sm:$0x1]
    %v62 = vld [vmem:[%s43 + $0x12] sm:$0x1]
    %v63 = vld [vmem:[%s43 + $0x13] sm:$0x1]
    %v64 = vld [vmem:[%s43 + $0x14] sm:$0x1]
    %v65 = vld [vmem:[%s43 + $0x15] sm:$0x1]
    %v66 = vld [vmem:[%s43 + $0x16] sm:$0x1]
    %v67 = vld [vmem:[%s43 + $0x17] sm:$0x1]
    %v68 = vld [vmem:[%s43 + $0x18] sm:$0x1]
    %v69 = vld [vmem:[%s43 + $0x19] sm:$0x1]
    %v70 = vld [vmem:[%s43 + $0x1a] sm:$0x1]
    %v71 = vld [vmem:[%s43 + $0x1b] sm:$0x1]
    %v72 = vld [vmem:[%s43 + $0x1c] sm:$0x1]
    %v73 = vld [vmem:[%s43 + $0x1d] sm:$0x1]
    %v74 = vld [vmem:[%s43 + $0x1e] sm:$0x1]
    %v75 = vld [vmem:[%s43 + $0x1f] sm:$0x1]
    %v76 = vld [vmem:[#allocation4] sm:$0xff]
    %v77 = vld [vmem:[#allocation4 + $0x8] sm:$0xff]
    %v78 = vld [vmem:[#allocation4 + $0x10] sm:$0xff]
    %v79 = vld [vmem:[#allocation4 + $0x18] sm:$0xff]
    %v80 = vld [vmem:[#allocation4 + $0x20] sm:$0xff]
    %v81 = vld [vmem:[#allocation4 + $0x28] sm:$0xff]
    %v82 = vld [vmem:[#allocation4 + $0x30] sm:$0xff]
    %v83 = vld [vmem:[#allocation4 + $0x38] sm:$0xff]
    %v84 = vld [vmem:[#allocation4 + $0x40] sm:$0xff]
    %v85 = vld [vmem:[#allocation4 + $0x48] sm:$0xff]
    %v86 = vld [vmem:[#allocation4 + $0x50] sm:$0xff]
    %v87 = vld [vmem:[#allocation4 + $0x58] sm:$0xff]
    %v88 = vld [vmem:[#allocation4 + $0x60] sm:$0xff]
    %v89 = vld [vmem:[#allocation4 + $0x68] sm:$0xff]
    %v90 = vld [vmem:[#allocation4 + $0x70] sm:$0xff]
    %v91 = vld [vmem:[#allocation4 + $0x78] sm:$0xff]
    %v92 = vld [vmem:[#allocation4 + $0x80] sm:$0xff]
    %v93 = vld [vmem:[#allocation4 + $0x88] sm:$0xff]
    %v94 = vld [vmem:[#allocation4 + $0x90] sm:$0xff]
    %v95 = vld [vmem:[#allocation4 + $0x98] sm:$0xff]
    %v96 = vld [vmem:[#allocation4 + $0xa0] sm:$0xff]
    %v97 = vld [vmem:[#allocation4 + $0xa8] sm:$0xff]
    %v98 = vld [vmem:[#allocation4 + $0xb0] sm:$0xff]
    %v99 = vld [vmem:[#allocation4 + $0xb8] sm:$0xff]
    %v100 = vld [vmem:[#allocation4 + $0xc0] sm:$0xff]
    %v101 = vld [vmem:[#allocation4 + $0xc8] sm:$0xff]
    %v102 = vld [vmem:[#allocation4 + $0xd0] sm:$0xff]
    %v103 = vld [vmem:[#allocation4 + $0xd8] sm:$0xff]
    %v104 = vld [vmem:[#allocation4 + $0xe0] sm:$0xff]
    %v105 = vld [vmem:[#allocation4 + $0xe8] sm:$0xff]
    %v106 = vld [vmem:[#allocation4 + $0xf0] sm:$0xff]
    %v107 = vld [vmem:[#allocation4 + $0xf8] sm:$0xff]
    %v140 = vlaneseq
    %v141 = vshrl.u32 %v140, 7
    %v142 = vsub.s32 0, %v141
    %v143 = vrot.slane %v44, %v142
    %v144 = vlaneseq
    %v145 = vshrl.u32 %v144, 7
    %v146 = vsub.s32 0, %v145
    %v147 = vrot.slane %v45, %v146
    %v148 = vlaneseq
    %v149 = vshrl.u32 %v148, 7
    %v150 = vsub.s32 0, %v149
    %v151 = vrot.slane %v46, %v150
    %v152 = vlaneseq
    %v153 = vshrl.u32 %v152, 7
    %v154 = vsub.s32 0, %v153
    %v155 = vrot.slane %v47, %v154
    %v156 = vlaneseq
    %v157 = vshrl.u32 %v156, 7
    %v158 = vsub.s32 0, %v157
    %v159 = vrot.slane %v48, %v158
    %v160 = vlaneseq
    %v161 = vshrl.u32 %v160, 7
    %v162 = vsub.s32 0, %v161
    %v163 = vrot.slane %v49, %v162
    %v164 = vlaneseq
    %v165 = vshrl.u32 %v164, 7
    %v166 = vsub.s32 0, %v165
    %v167 = vrot.slane %v50, %v166
    %v168 = vlaneseq
    %v169 = vshrl.u32 %v168, 7
    %v170 = vsub.s32 0, %v169
    %v171 = vrot.slane %v51, %v170
    %v172 = vlaneseq
    %v173 = vshrl.u32 %v172, 7
    %v174 = vsub.s32 0, %v173
    %v175 = vrot.slane %v52, %v174
    %v176 = vlaneseq
    %v177 = vshrl.u32 %v176, 7
    %v178 = vsub.s32 0, %v177
    %v179 = vrot.slane %v53, %v178
    %v180 = vlaneseq
    %v181 = vshrl.u32 %v180, 7
    %v182 = vsub.s32 0, %v181
    %v183 = vrot.slane %v54, %v182
    %v184 = vlaneseq
    %v185 = vshrl.u32 %v184, 7
    %v186 = vsub.s32 0, %v185
    %v187 = vrot.slane %v55, %v186
    %v188 = vlaneseq
    %v189 = vshrl.u32 %v188, 7
    %v190 = vsub.s32 0, %v189
    %v191 = vrot.slane %v56, %v190
    %v192 = vlaneseq
    %v193 = vshrl.u32 %v192, 7
    %v194 = vsub.s32 0, %v193
    %v195 = vrot.slane %v57, %v194
    %v196 = vlaneseq
    %v197 = vshrl.u32 %v196, 7
    %v198 = vsub.s32 0, %v197
    %v199 = vrot.slane %v58, %v198
    %v200 = vlaneseq
    %v201 = vshrl.u32 %v200, 7
    %v202 = vsub.s32 0, %v201
    %v203 = vrot.slane %v59, %v202
    %v204 = vlaneseq
    %v205 = vshrl.u32 %v204, 7
    %v206 = vsub.s32 0, %v205
    %v207 = vrot.slane %v60, %v206
    %v208 = vlaneseq
    %v209 = vshrl.u32 %v208, 7
    %v210 = vsub.s32 0, %v209
    %v211 = vrot.slane %v61, %v210
    %v212 = vlaneseq
    %v213 = vshrl.u32 %v212, 7
    %v214 = vsub.s32 0, %v213
    %v215 = vrot.slane %v62, %v214
    %v216 = vlaneseq
    %v217 = vshrl.u32 %v216, 7
    %v218 = vsub.s32 0, %v217
    %v219 = vrot.slane %v63, %v218
    %v220 = vlaneseq
    %v221 = vshrl.u32 %v220, 7
    %v222 = vsub.s32 0, %v221
    %v223 = vrot.slane %v64, %v222
    %v224 = vlaneseq
    %v225 = vshrl.u32 %v224, 7
    %v226 = vsub.s32 0, %v225
    %v227 = vrot.slane %v65, %v226
    %v228 = vlaneseq
    %v229 = vshrl.u32 %v228, 7
    %v230 = vsub.s32 0, %v229
    %v231 = vrot.slane %v66, %v230
    %v232 = vlaneseq
    %v233 = vshrl.u32 %v232, 7
    %v234 = vsub.s32 0, %v233
    %v235 = vrot.slane %v67, %v234
    %v236 = vlaneseq
    %v237 = vshrl.u32 %v236, 7
    %v238 = vsub.s32 0, %v237
    %v239 = vrot.slane %v68, %v238
    %v240 = vlaneseq
    %v241 = vshrl.u32 %v240, 7
    %v242 = vsub.s32 0, %v241
    %v243 = vrot.slane %v69, %v242
    %v244 = vlaneseq
    %v245 = vshrl.u32 %v244, 7
    %v246 = vsub.s32 0, %v245
    %v247 = vrot.slane %v70, %v246
    %v248 = vlaneseq
    %v249 = vshrl.u32 %v248, 7
    %v250 = vsub.s32 0, %v249
    %v251 = vrot.slane %v71, %v250
    %v252 = vlaneseq
    %v253 = vshrl.u32 %v252, 7
    %v254 = vsub.s32 0, %v253
    %v255 = vrot.slane %v72, %v254
    %v256 = vlaneseq
    %v257 = vshrl.u32 %v256, 7
    %v258 = vsub.s32 0, %v257
    %v259 = vrot.slane %v73, %v258
    %v260 = vlaneseq
    %v261 = vshrl.u32 %v260, 7
    %v262 = vsub.s32 0, %v261
    %v263 = vrot.slane %v74, %v262
    %v264 = vlaneseq
    %v265 = vshrl.u32 %v264, 7
    %v266 = vsub.s32 0, %v265
    %v267 = vrot.slane %v75, %v266
    %v300 = vadd.f32 %v76, %v143
    %v301 = vadd.f32 %v77, %v147
    %v302 = vadd.f32 %v78, %v151
    %v303 = vadd.f32 %v79, %v155
    %v304 = vadd.f32 %v80, %v159
    %v305 = vadd.f32 %v81, %v163
    %v306 = vadd.f32 %v82, %v167
    %v307 = vadd.f32 %v83, %v171
    %v308 = vadd.f32 %v84, %v175
    %v309 = vadd.f32 %v85, %v179
    %v310 = vadd.f32 %v86, %v183
    %v311 = vadd.f32 %v87, %v187
    %v312 = vadd.f32 %v88, %v191
    %v313 = vadd.f32 %v89, %v195
    %v314 = vadd.f32 %v90, %v199
    %v315 = vadd.f32 %v91, %v203
    %v316 = vadd.f32 %v92, %v207
    %v317 = vadd.f32 %v93, %v211
    %v318 = vadd.f32 %v94, %v215
    %v319 = vadd.f32 %v95, %v219
    %v320 = vadd.f32 %v96, %v223
    %v321 = vadd.f32 %v97, %v227
    %v322 = vadd.f32 %v98, %v231
    %v323 = vadd.f32 %v99, %v235
    %v324 = vadd.f32 %v100, %v239
    %v325 = vadd.f32 %v101, %v243
    %v326 = vadd.f32 %v102, %v247
    %v327 = vadd.f32 %v103, %v251
    %v328 = vadd.f32 %v104, %v255
    %v329 = vadd.f32 %v105, %v259
    %v330 = vadd.f32 %v106, %v263
    %v331 = vadd.f32 %v107, %v267
    %332 = vst [vmem:[#allocation9] sm:$0xff] %v300
    %333 = vst [vmem:[#allocation9 + $0x8] sm:$0xff] %v301
    %334 = vst [vmem:[#allocation9 + $0x10] sm:$0xff] %v302
    %335 = vst [vmem:[#allocation9 + $0x18] sm:$0xff] %v303
    %336 = vst [vmem:[#allocation9 + $0x20] sm:$0xff] %v304
    %337 = vst [vmem:[#allocation9 + $0x28] sm:$0xff] %v305
    %338 = vst [vmem:[#allocation9 + $0x30] sm:$0xff] %v306
    %339 = vst [vmem:[#allocation9 + $0x38] sm:$0xff] %v307
    %340 = vst [vmem:[#allocation9 + $0x40] sm:$0xff] %v308
    %341 = vst [vmem:[#allocation9 + $0x48] sm:$0xff] %v309
    %342 = vst [vmem:[#allocation9 + $0x50] sm:$0xff] %v310
    %343 = vst [vmem:[#allocation9 + $0x58] sm:$0xff] %v311
    %344 = vst [vmem:[#allocation9 + $0x60] sm:$0xff] %v312
    %345 = vst [vmem:[#allocation9 + $0x68] sm:$0xff] %v313
    %346 = vst [vmem:[#allocation9 + $0x70] sm:$0xff] %v314
    %347 = vst [vmem:[#allocation9 + $0x78] sm:$0xff] %v315
    %348 = vst [vmem:[#allocation9 + $0x80] sm:$0xff] %v316
    %349 = vst [vmem:[#allocation9 + $0x88] sm:$0xff] %v317
    %350 = vst [vmem:[#allocation9 + $0x90] sm:$0xff] %v318
    %351 = vst [vmem:[#allocation9 + $0x98] sm:$0xff] %v319
    %352 = vst [vmem:[#allocation9 + $0xa0] sm:$0xff] %v320
    %353 = vst [vmem:[#allocation9 + $0xa8] sm:$0xff] %v321
    %354 = vst [vmem:[#allocation9 + $0xb0] sm:$0xff] %v322
    %355 = vst [vmem:[#allocation9 + $0xb8] sm:$0xff] %v323
    %356 = vst [vmem:[#allocation9 + $0xc0] sm:$0xff] %v324
    %357 = vst [vmem:[#allocation9 + $0xc8] sm:$0xff] %v325
    %358 = vst [vmem:[#allocation9 + $0xd0] sm:$0xff] %v326
    %359 = vst [vmem:[#allocation9 + $0xd8] sm:$0xff] %v327
    %360 = vst [vmem:[#allocation9 + $0xe0] sm:$0xff] %v328
    %361 = vst [vmem:[#allocation9 + $0xe8] sm:$0xff] %v329
    %362 = vst [vmem:[#allocation9 + $0xf0] sm:$0xff] %v330
    %363 = vst [vmem:[#allocation9 + $0xf8] sm:$0xff] %v331
    // Predicated region
    $region18: #{tpu_custom_call.1} parent=1 // pred_check
      _
    $region19: #{tpu_custom_call.1} parent=1 // pred_check_branch
      %365 = sbr.rel (0) target = $region21
    $region20: #{tpu_custom_call.1} parent=1 // pred_region
      %s367 = ssub.s32 4096, 4096
      %368 = vsyncadd [#allocation6], %s367
      %s369 = sshll.u32 [#allocation9], 4
      %s370 = int_to_ptr.vmem [resolvable:$true] %s369
      %375 = dma.vmem_to_hbm [thread:$0]  %s370, 4096, %s3, [#allocation6], 128, 128, 8
    $region21: #{tpu_custom_call.1} parent=1 // pred_fallthru
      _
    // Predicated region
    $region22: #{tpu_custom_call.1} parent=1 // pred_check
      _
    $region23: #{tpu_custom_call.1} parent=1 // pred_check_branch
      %377 = sbr.rel (0) target = $region25
    $region24: #{tpu_custom_call.1} parent=1 // pred_region
      %378 = dma.done [#allocation6], 4096
    $region25: #{tpu_custom_call.1} parent=1 // pred_fallthru
      _
    %379 = vsyncpa [#allocation5], 1
    %380 = vsyncpa [#allocation8], 1
    %381 = vsyncpa [#allocation6], 1

</llo_original>
